<compile_context>
chip_gen: v6e
topology: v6e:2x2x1
jax: 0.10.0
libtpu: 0.0.40
codegen_flags: <defaults>
</compile_context>

<pallas_src>
import jax
import jax.numpy as jnp
from jax.experimental import pallas as pl
from jax.experimental.pallas import tpu as pltpu


def _cross_attention_kernel(
    x_ref,    # [1, C, TQ]  spatial tile of x, channel-major (NCHW flattened)
    k_ref,    # [1, S, D]   pre-projected keys (per batch, resident)
    vt_ref,   # [1, D, S]   pre-projected values, transposed (per batch, resident)
    wq_ref,   # [D, C]      folded Q projection: ((win @ wq) * scale).T
    bq_ref,   # [D, 1]      folded Q bias:      ((bin @ wq + bq) * scale).T
    wo_ref,   # [C, D]      proj_out weight, transposed
    bo_ref,   # [C, 1]      proj_out bias, as a column
    out_ref,  # [1, C, TQ]
    att_ref,  # [1, TQ, S]  attention weights, already in module layout
):
    x_t = x_ref[0]           # [C, TQ]  native compute dtype (bf16-friendly)
    cdt = x_t.dtype          # all MXU operands stay in this dtype; acc is f32

    # Q projection with proj_in + softmax scale folded in:  q^T = Wq'^T x^T + bq'
    q_t = (jnp.dot(wq_ref[...], x_t, preferred_element_type=jnp.float32)
           + bq_ref[...]).astype(cdt)                                   # [D, TQ]

    # logits^T = K @ Q^T  (scale already folded into Wq')
    logits_t = jnp.dot(k_ref[0], q_t, preferred_element_type=jnp.float32)  # [S, TQ]

    # Softmax over the sequence axis (sublane axis here), in f32.
    m = jnp.max(logits_t, axis=0, keepdims=True)                        # [1, TQ]
    e = jnp.exp(logits_t - m)                                           # [S, TQ]
    den = jnp.sum(e, axis=0, keepdims=True)                             # [1, TQ]
    inv = pl.reciprocal(den, approx=True)        # EUP slot (nearly free)
    inv = inv * (2.0 - den * inv)                # one Newton step -> full f32 accuracy
    p_t = e * inv                                                       # [S, TQ] f32

    # Attention-weighted sum of values:  o^T = V^T @ P^T
    o_t = jnp.dot(vt_ref[0], p_t.astype(cdt),
                  preferred_element_type=jnp.float32)                   # [D, TQ]

    # proj_out (1x1 conv as linear), still feature-major:  out^T = Wo^T o^T + bo
    out_t = jnp.dot(wo_ref[...], o_t.astype(cdt),
                    preferred_element_type=jnp.float32) + bo_ref[...]   # [C, TQ]

    out_ref[0] = out_t.astype(out_ref.dtype)       # lane-dense store (TQ on lanes)
    # In-kernel XLU transpose -> att is written directly in the module's
    # [HW, S] layout; no wrapper swapaxes (saves a full extra att read+write).
    att_ref[0] = p_t.T.astype(att_ref.dtype)       # [TQ, S]


def _tpu_vmem_capacity_bytes():
    """Physical VMEM per TensorCore; conservative (v7x-sized) fallback."""
    try:
        info = pltpu.get_tpu_info()
        for name in ("vmem_capacity_bytes", "vmem_size_bytes", "vmem_bytes"):
            v = getattr(info, name, None)
            if v:
                return int(v)
    except Exception:
        pass
    return 64 * 1024 * 1024


def _choose_tile(hw, requested, batch):
    """Spatial tile: a 128-multiple, <= requested when possible, preferring an
    even total grid (batch * n_tiles) so both v7x TensorCores stay busy."""
    hw_ceil = -(-hw // 128) * 128                    # HW rounded up to lanes
    t = min(max((requested // 128) * 128, 128), hw_ceil)

    def steps(tile):
        return batch * (-(-hw // tile))

    if steps(t) % 2 == 1:
        cand = t - 128
        while cand >= 128:
            if steps(cand) % 2 == 0:
                return cand
            cand -= 128
    return t


def cross_attention_pallas(x_nchw, context, params, *, tq=None,
                           att_dtype=jnp.float32):
    """x_nchw: [B, C, H, W], context: [B, S, D].

    Returns (out [B, C, H, W], att_weights [B, H*W, S]) like the PyTorch module.
    `tq=None` picks the spatial tile per generation (2048 on 128-MiB-VMEM parts,
    1024 otherwise).  `att_dtype=bf16` halves the attention writeback (note:
    lower precision than the module contract).
    """
    B, C, H, W = x_nchw.shape
    _, S, D = context.shape
    HW = H * W
    scale = float(D) ** (-0.5)
    cdt = x_nchw.dtype                      # compute dtype fed to the MXU

    win, bin_, wq, bq, wk, bk, wv, bv, wo, bo = params

    # --- one-time (tiny) wrapper-side weight algebra, f32 then cast to cdt ----
    # Fold proj_in (1x1 conv) + softmax scale into the Q projection.
    wq_t = ((win @ wq) * scale).T.astype(cdt)          # [D, C]
    bq_t = ((bin_ @ wq + bq) * scale).T.astype(cdt)    # [D, 1]
    # proj_out in feature-major (transposed) form.
    wo_t = wo.T.astype(cdt)                            # [C, D]
    bo_t = bo.T.astype(cdt)                            # [C, 1]
    # K/V hoisted out of the kernel: tiny [B,S,D] matmuls done once by XLA.
    k = (context @ wk + bk).astype(cdt)                         # [B, S, D]
    v_t = jnp.swapaxes(context @ wv + bv, 1, 2).astype(cdt)     # [B, D, S]

    # NCHW -> [B, C, HW]: pure reshape, no transpose needed in this layout.
    x_flat = x_nchw.reshape(B, C, HW)

    # --- per-generation sizing (v5e/v6e: 128 MiB VMEM, v7x: 64 MiB) -----------
    vmem_cap = _tpu_vmem_capacity_bytes()
    vmem_limit = min(int(vmem_cap * 0.8), 112 * 1024 * 1024)
    if tq is None:
        tq = 2048 if vmem_cap >= 96 * 1024 * 1024 else 1024

    TQ = _choose_tile(HW, tq, B)
    n_tiles = -(-HW // TQ)
    HW_pad = n_tiles * TQ
    if HW_pad != HW:
        # Pad the spatial axis instead of making the whole HW axis resident.
        x_flat = jnp.pad(x_flat, ((0, 0), (0, 0), (0, HW_pad - HW)))

    def wspec(shape):
        # Constant index_map -> never re-fetched; single buffer avoids the
        # default double-buffer VMEM waste for resident weights.
        return pl.BlockSpec(shape, lambda b, i: (0,) * len(shape),
                            pipeline_mode=pl.Buffered(1))

    out_flat, att = pl.pallas_call(
        _cross_attention_kernel,
        out_shape=(
            jax.ShapeDtypeStruct((B, C, HW_pad), x_nchw.dtype),
            jax.ShapeDtypeStruct((B, HW_pad, S), att_dtype),
        ),
        grid_spec=pltpu.PrefetchScalarGridSpec(
            num_scalar_prefetch=0,
            grid=(B, n_tiles),
            in_specs=[
                pl.BlockSpec((1, C, TQ), lambda b, i: (b, 0, i)),   # x tile (streamed)
                pl.BlockSpec((1, S, D), lambda b, i: (b, 0, 0)),    # K  (per-batch)
                pl.BlockSpec((1, D, S), lambda b, i: (b, 0, 0)),    # V^T (per-batch)
                wspec((D, C)), wspec((D, 1)),                       # folded Wq / bq
                wspec((C, D)), wspec((C, 1)),                       # proj_out Wo / bo
            ],
            out_specs=[
                pl.BlockSpec((1, C, TQ), lambda b, i: (b, 0, i)),   # out^T (lane-dense)
                pl.BlockSpec((1, TQ, S), lambda b, i: (b, i, 0)),   # att (module layout)
            ],
        ),
        compiler_params=pltpu.CompilerParams(
            dimension_semantics=("parallel", "parallel"),
            vmem_limit_bytes=vmem_limit,
        ),
    )(x_flat, k, v_t, wq_t, bq_t, wo_t, bo_t)

    if HW_pad != HW:
        out_flat = out_flat[:, :, :HW]
        att = att[:, :HW, :]
    return out_flat.reshape(B, C, H, W), att


def cross_attention_reference(x_nchw, context, params):
    """Pure-JAX reference mirroring the PyTorch forward (pad_mask=None)."""
    B, C, H, W = x_nchw.shape
    _, S, D = context.shape
    win, bin_, wq, bq, wk, bk, wv, bv, wo, bo = params
    scale = float(D) ** (-0.5)

    x = jnp.transpose(x_nchw, (0, 2, 3, 1)).reshape(B, H * W, C)
    xp = x @ win + bin_
    q = xp @ wq + bq
    k = context @ wk + bk
    v = context @ wv + bv
    att = jnp.einsum("bid,bjd->bij", q, k) * scale
    att = jax.nn.softmax(att, axis=-1)
    o = jnp.einsum("bij,bjd->bid", att, v)
    out = o @ wo + bo
    out = jnp.transpose(out.reshape(B, H, W, C), (0, 3, 1, 2))
    return out, att


def init_params(key, in_channels, emb_dim):
    """Deterministic synthetic params. Weights stored as [in, out]."""
    ks = jax.random.split(key, 10)

    def w(k, fan_in, fan_out):
        bound = 1.0 / jnp.sqrt(fan_in)
        return jax.random.uniform(k, (fan_in, fan_out), jnp.float32, -bound, bound)

    def bvec(k, fan_in, fan_out):
        bound = 1.0 / jnp.sqrt(fan_in)
        return jax.random.uniform(k, (1, fan_out), jnp.float32, -bound, bound)

    C, D = in_channels, emb_dim
    return (
        w(ks[0], C, D), bvec(ks[1], C, D),   # proj_in  (1x1 conv)
        w(ks[2], D, D), bvec(ks[3], D, D),   # Wq
        w(ks[4], D, D), bvec(ks[5], D, D),   # Wk
        w(ks[6], D, D), bvec(ks[7], D, D),   # Wv
        w(ks[8], D, C), bvec(ks[9], D, C),   # proj_out (1x1 conv)
    )


if __name__ == "__main__":
    B, C, H, W = 2, 4, 16, 16
    S, D = 8, 32

    key = jax.random.PRNGKey(0)
    kx, kc, kp = jax.random.split(key, 3)
    x = jax.random.normal(kx, (B, C, H, W), jnp.float32)
    context = jax.random.normal(kc, (B, S, D), jnp.float32)
    params = init_params(kp, C, D)

    # tq=128 so the small test exercises the tiled HW grid axis (grid=(2, 2)).
    out, att = cross_attention_pallas(x, context, params, tq=128)
    jax.block_until_ready((out, att))

    out_ref, att_ref = cross_attention_reference(x, context, params)
    assert out.shape == (B, C, H, W) and att.shape == (B, H * W, S)
    assert jnp.allclose(out, out_ref, atol=1e-4, rtol=1e-4)
    assert jnp.allclose(att, att_ref, atol=3e-5, rtol=3e-5)

    # bf16 path: weights are cast to the activation dtype, so the MXU runs its
    # native low-precision mode (f32 accumulation).  Loose tolerances.
    out_bf, att_bf = cross_attention_pallas(
        x.astype(jnp.bfloat16), context.astype(jnp.bfloat16), params, tq=128)
    jax.block_until_ready((out_bf, att_bf))
    assert jnp.allclose(out_bf.astype(jnp.float32), out_ref, atol=5e-2, rtol=5e-2)
    assert jnp.allclose(att_bf.astype(jnp.float32), att_ref, atol=3e-2, rtol=3e-2)

    print("KERNEL_OK")
</pallas_src>

<mosaic_0001>
module attributes {stable_mosaic.version = 11 : i64} {
  func.func @_cross_attention_kernel(%arg0: i32, %arg1: i32, %arg2: memref<1x4x128xf32, #tpu.memory_space<vmem>>, %arg3: memref<1x8x32xf32, #tpu.memory_space<vmem>>, %arg4: memref<1x32x8xf32, #tpu.memory_space<vmem>>, %arg5: memref<32x4xf32, #tpu.memory_space<vmem>>, %arg6: memref<32x1xf32, #tpu.memory_space<vmem>>, %arg7: memref<4x32xf32, #tpu.memory_space<vmem>>, %arg8: memref<4x1xf32, #tpu.memory_space<vmem>>, %arg9: memref<1x4x128xf32, #tpu.memory_space<vmem>>, %arg10: memref<1x128x8xf32, #tpu.memory_space<vmem>>) attributes {dimension_semantics = [#tpu.dimension_semantics<parallel>, #tpu.dimension_semantics<parallel>], iteration_bounds = array<i64: 2, 2>, scalar_prefetch = 0 : i64, scratch_operands = 0 : i64, tpu.core_type = #tpu.core_type<tc>, window_params = [{transform_indices = @transform_0, window_bounds = array<i64: 1, 4, 128>}, {transform_indices = @transform_1, window_bounds = array<i64: 1, 8, 32>}, {transform_indices = @transform_2, window_bounds = array<i64: 1, 32, 8>}, {pipeline_mode = #tpu.pipeline_mode<synchronous>, transform_indices = @transform_3, window_bounds = array<i64: 32, 4>}, {pipeline_mode = #tpu.pipeline_mode<synchronous>, transform_indices = @transform_4, window_bounds = array<i64: 32, 1>}, {pipeline_mode = #tpu.pipeline_mode<synchronous>, transform_indices = @transform_5, window_bounds = array<i64: 4, 32>}, {pipeline_mode = #tpu.pipeline_mode<synchronous>, transform_indices = @transform_6, window_bounds = array<i64: 4, 1>}, {transform_indices = @transform_7, window_bounds = array<i64: 1, 4, 128>}, {transform_indices = @transform_8, window_bounds = array<i64: 1, 128, 8>}]} {
    %c0 = arith.constant 0 : index
    %c0_0 = arith.constant 0 : index
    %c0_1 = arith.constant 0 : index
    %0 = vector.load %arg2[%c0, %c0_0, %c0_1] : memref<1x4x128xf32, #tpu.memory_space<vmem>>, vector<1x4x128xf32>
    %1 = vector.shape_cast %0 : vector<1x4x128xf32> to vector<4x128xf32>
    %c0_2 = arith.constant 0 : index
    %c0_3 = arith.constant 0 : index
    %2 = vector.load %arg5[%c0_2, %c0_3] : memref<32x4xf32, #tpu.memory_space<vmem>>, vector<32x4xf32>
    %cst = arith.constant dense<0.000000e+00> : vector<32x128xf32>
    %3 = tpu.matmul %2, %1, %cst {dimension_numbers = #tpu.dot_dimension_numbers<[1], [0], [0], [1], [0, 0, 1, 1], [], []>} : vector<32x4xf32>, vector<4x128xf32>, vector<32x128xf32> -> vector<32x128xf32>
    %c0_4 = arith.constant 0 : index
    %c0_5 = arith.constant 0 : index
    %4 = vector.load %arg6[%c0_4, %c0_5] : memref<32x1xf32, #tpu.memory_space<vmem>>, vector<32x1xf32>
    %5 = vector.broadcast %4 : vector<32x1xf32> to vector<32x128xf32>
    %6 = arith.addf %3, %5 : vector<32x128xf32>
    %c0_6 = arith.constant 0 : index
    %c0_7 = arith.constant 0 : index
    %c0_8 = arith.constant 0 : index
    %7 = vector.load %arg3[%c0_6, %c0_7, %c0_8] : memref<1x8x32xf32, #tpu.memory_space<vmem>>, vector<1x8x32xf32>
    %8 = vector.shape_cast %7 : vector<1x8x32xf32> to vector<8x32xf32>
    %cst_9 = arith.constant dense<0.000000e+00> : vector<8x128xf32>
    %9 = tpu.matmul %8, %6, %cst_9 {dimension_numbers = #tpu.dot_dimension_numbers<[1], [0], [0], [1], [0, 0, 1, 1], [], []>} : vector<8x32xf32>, vector<32x128xf32>, vector<8x128xf32> -> vector<8x128xf32>
    %cst_10 = arith.constant dense<0xFF800000> : vector<128xf32>
    %10 = vector.multi_reduction <maximumf>, %9, %cst_10 [0] : vector<8x128xf32> to vector<128xf32>
    %11 = vector.shape_cast %10 : vector<128xf32> to vector<1x128xf32>
    %12 = vector.broadcast %11 : vector<1x128xf32> to vector<8x128xf32>
    %13 = arith.subf %9, %12 : vector<8x128xf32>
    %14 = math.exp %13 : vector<8x128xf32>
    %cst_11 = arith.constant dense<0.000000e+00> : vector<128xf32>
    %15 = vector.multi_reduction <add>, %14, %cst_11 [0] : vector<8x128xf32> to vector<128xf32>
    %16 = vector.shape_cast %15 : vector<128xf32> to vector<1x128xf32>
    %17 = tpu.reciprocal %16 {approx = true} : vector<1x128xf32> -> vector<1x128xf32>
    %18 = arith.mulf %16, %17 : vector<1x128xf32>
    %cst_12 = arith.constant 2.000000e+00 : f32
    %19 = vector.broadcast %cst_12 : f32 to vector<1x128xf32>
    %20 = arith.subf %19, %18 : vector<1x128xf32>
    %21 = arith.mulf %17, %20 : vector<1x128xf32>
    %22 = vector.broadcast %21 : vector<1x128xf32> to vector<8x128xf32>
    %23 = arith.mulf %14, %22 : vector<8x128xf32>
    %c0_13 = arith.constant 0 : index
    %c0_14 = arith.constant 0 : index
    %c0_15 = arith.constant 0 : index
    %24 = vector.load %arg4[%c0_13, %c0_14, %c0_15] : memref<1x32x8xf32, #tpu.memory_space<vmem>>, vector<1x32x8xf32>
    %25 = vector.shape_cast %24 : vector<1x32x8xf32> to vector<32x8xf32>
    %cst_16 = arith.constant dense<0.000000e+00> : vector<32x128xf32>
    %26 = tpu.matmul %25, %23, %cst_16 {dimension_numbers = #tpu.dot_dimension_numbers<[1], [0], [0], [1], [0, 0, 1, 1], [], []>} : vector<32x8xf32>, vector<8x128xf32>, vector<32x128xf32> -> vector<32x128xf32>
    %c0_17 = arith.constant 0 : index
    %c0_18 = arith.constant 0 : index
    %27 = vector.load %arg7[%c0_17, %c0_18] : memref<4x32xf32, #tpu.memory_space<vmem>>, vector<4x32xf32>
    %cst_19 = arith.constant dense<0.000000e+00> : vector<4x128xf32>
    %28 = tpu.matmul %27, %26, %cst_19 {dimension_numbers = #tpu.dot_dimension_numbers<[1], [0], [0], [1], [0, 0, 1, 1], [], []>} : vector<4x32xf32>, vector<32x128xf32>, vector<4x128xf32> -> vector<4x128xf32>
    %c0_20 = arith.constant 0 : index
    %c0_21 = arith.constant 0 : index
    %29 = vector.load %arg8[%c0_20, %c0_21] : memref<4x1xf32, #tpu.memory_space<vmem>>, vector<4x1xf32>
    %30 = vector.broadcast %29 : vector<4x1xf32> to vector<4x128xf32>
    %31 = arith.addf %28, %30 : vector<4x128xf32>
    %c0_22 = arith.constant 0 : index
    %c0_23 = arith.constant 0 : index
    %c0_24 = arith.constant 0 : index
    %32 = vector.load %arg9[%c0_22, %c0_23, %c0_24] : memref<1x4x128xf32, #tpu.memory_space<vmem>>, vector<1x4x128xf32>
    %33 = vector.shape_cast %32 : vector<1x4x128xf32> to vector<4x128xf32>
    %34 = vector.shape_cast %31 : vector<4x128xf32> to vector<1x4x128xf32>
    tpu.vector_store %arg9[%c0_22, %c0_23, %c0_24], %34 {strides = array<i32>} : memref<1x4x128xf32, #tpu.memory_space<vmem>>, vector<1x4x128xf32>,
    %35 = tpu.transpose %23, [1, 0] : vector<8x128xf32> -> vector<128x8xf32>
    %c0_25 = arith.constant 0 : index
    %c0_26 = arith.constant 0 : index
    %c0_27 = arith.constant 0 : index
    %36 = vector.load %arg10[%c0_25, %c0_26, %c0_27] : memref<1x128x8xf32, #tpu.memory_space<vmem>>, vector<1x128x8xf32>
    %37 = vector.shape_cast %36 : vector<1x128x8xf32> to vector<128x8xf32>
    %38 = vector.shape_cast %35 : vector<128x8xf32> to vector<1x128x8xf32>
    tpu.vector_store %arg10[%c0_25, %c0_26, %c0_27], %38 {strides = array<i32>} : memref<1x128x8xf32, #tpu.memory_space<vmem>>, vector<1x128x8xf32>,
    return
  }
  func.func @transform_0(%arg0: i32, %arg1: i32) -> (i32, i32, i32) {
    %c0_i32 = arith.constant 0 : i32
    %c0_i32_0 = arith.constant 0 : i32
    return %arg0, %c0_i32, %arg1 : i32, i32, i32
  }
  func.func @transform_1(%arg0: i32, %arg1: i32) -> (i32, i32, i32) {
    %c0_i32 = arith.constant 0 : i32
    %c0_i32_0 = arith.constant 0 : i32
    %c0_i32_1 = arith.constant 0 : i32
    return %arg0, %c0_i32, %c0_i32_0 : i32, i32, i32
  }
  func.func @transform_2(%arg0: i32, %arg1: i32) -> (i32, i32, i32) {
    %c0_i32 = arith.constant 0 : i32
    %c0_i32_0 = arith.constant 0 : i32
    %c0_i32_1 = arith.constant 0 : i32
    return %arg0, %c0_i32, %c0_i32_0 : i32, i32, i32
  }
  func.func @transform_3(%arg0: i32, %arg1: i32) -> (i32, i32) {
    %c0_i32 = arith.constant 0 : i32
    %c0_i32_0 = arith.constant 0 : i32
    %c0_i32_1 = arith.constant 0 : i32
    return %c0_i32, %c0_i32_0 : i32, i32
  }
  func.func @transform_4(%arg0: i32, %arg1: i32) -> (i32, i32) {
    %c0_i32 = arith.constant 0 : i32
    %c0_i32_0 = arith.constant 0 : i32
    %c0_i32_1 = arith.constant 0 : i32
    return %c0_i32, %c0_i32_0 : i32, i32
  }
  func.func @transform_5(%arg0: i32, %arg1: i32) -> (i32, i32) {
    %c0_i32 = arith.constant 0 : i32
    %c0_i32_0 = arith.constant 0 : i32
    %c0_i32_1 = arith.constant 0 : i32
    return %c0_i32, %c0_i32_0 : i32, i32
  }
  func.func @transform_6(%arg0: i32, %arg1: i32) -> (i32, i32) {
    %c0_i32 = arith.constant 0 : i32
    %c0_i32_0 = arith.constant 0 : i32
    %c0_i32_1 = arith.constant 0 : i32
    return %c0_i32, %c0_i32_0 : i32, i32
  }
  func.func @transform_7(%arg0: i32, %arg1: i32) -> (i32, i32, i32) {
    %c0_i32 = arith.constant 0 : i32
    %c0_i32_0 = arith.constant 0 : i32
    return %arg0, %c0_i32, %arg1 : i32, i32, i32
  }
  func.func @transform_8(%arg0: i32, %arg1: i32) -> (i32, i32, i32) {
    %c0_i32 = arith.constant 0 : i32
    %c0_i32_0 = arith.constant 0 : i32
    return %arg0, %arg1, %c0_i32 : i32, i32, i32
  }
}

</mosaic_0001>

<llo_original>
// kernel: tpu_custom_call.1
$region0: #{tpu_custom_call.1}
  #allocation0 [shape = 'u32[]', space=smem, size = 0x4, offset = 0x4, fixed_abs, tag = 'smem constant byte address 0x4 - core index']
  #allocation1 [shape = 'u32[144,128]{1,0:T(1,128)}', space=vmem, size = 0x12000, scoped, tag = 'internal scratch']
  %s0 = inlined_call_operand.vmem [shape: f32[2,4,256], index: 0, kind: input, shape index: {}]
  %s1 = inlined_call_operand.vmem [shape: f32[2,8,32], index: 1, kind: input, shape index: {}]
  %s2 = inlined_call_operand.vmem [shape: f32[2,32,8], index: 2, kind: input, shape index: {}]
  %s3 = inlined_call_operand.vmem [shape: f32[32,4], index: 3, kind: input, shape index: {}]
  %s4 = inlined_call_operand.vmem [shape: f32[32,1], index: 4, kind: input, shape index: {}]
  %s5 = inlined_call_operand.vmem [shape: f32[4,32], index: 5, kind: input, shape index: {}]
  %s6 = inlined_call_operand.vmem [shape: f32[4,1], index: 6, kind: input, shape index: {}]
  %s7 = inlined_call_operand.hbm [shape: f32[2,4,256], index: 7, kind: output, shape index: {0}]
  %s8 = inlined_call_operand.vmem [shape: f32[2,256,8], index: 8, kind: output, shape index: {1}]
  %9 = xla_tuple %s7, %s8
  %s10 = sld [smem:[#allocation0]]
  $region69: #{tpu_custom_call.1} parent=0
    _
  %s12 = ssub.s32 1, %s10
  %s13 = scalar_select 0, %s12, %s10
  $region1: #{tpu_custom_call.1} parent=0
    #allocation2 [shape = 'u8[4096]{0}', space=vmem, size = 0x1000, scoped, tag = 'output window, operand 0']
    #allocation3 [shape = 's32[2]{0}', space=sflag, size = 0x8, scoped, tag = 'scoped memory for tpu_custom_call.1']
    %14 = vsyncpa [#allocation3], 0
    %s15 = scalar_lea.sflag [#allocation3], 1
    %16 = vsyncpa %s15, 0
    loop: start=0, step=1, limit=6
    $region2: #{tpu_custom_call.1} parent=1 // loop_pre_header
      _
    $region3: #{tpu_custom_call.1} parent=1 // loop_header
      %s18 = sphi 0, %s22
      %p19 = scmp.ge.s32.totalorder %s18, 6
      %s25 = sphi 0, %s37
      %s26 = sphi 0, %s33
      %s27 = sphi 0, %s25
      %s28 = sphi 0, %s26
      %s29 = sphi 0, %s27
      %s30 = sphi 0, %s28
      %s42 = sphi 0, %s44
      %s45 = sphi 0, %s42
      %s46 = sphi 0, %s45
      %s62 = sphi 0, %s46
      %s68 = sphi 0, %s70
      %s71 = sphi 0, %s68
      %s72 = sphi 0, %s71
      %s88 = sphi 0, %s72
      %s94 = sphi 0, %s96
      %s97 = sphi 0, %s94
      %s98 = sphi 0, %s97
      %s114 = sphi 0, %s98
      %s118 = sphi 0, %s118
      %s120 = sphi 0, %s118
      %s121 = sphi 0, %s120
      %s135 = sphi 0, %s121
      %s139 = sphi 0, %s139
      %s141 = sphi 0, %s139
      %s142 = sphi 0, %s141
      %s156 = sphi 0, %s142
      %s160 = sphi 0, %s160
      %s162 = sphi 0, %s160
      %s163 = sphi 0, %s162
      %s177 = sphi 0, %s163
      %s181 = sphi 0, %s181
      %s183 = sphi 0, %s181
      %s184 = sphi 0, %s183
      %s198 = sphi 0, %s184
      %s206 = sphi 0, %s208
      %s209 = sphi 0, %s206
      %s210 = sphi 0, %s209
      %s226 = sphi 0, %s210
      %s234 = sphi 0, %s236
      %s237 = sphi 0, %s234
      %s238 = sphi 0, %s237
      %s254 = sphi 0, %s238
    $region4: #{tpu_custom_call.1} parent=1 // loop_header_branch
      %21 = sbr.rel (%p19) target = $region8
    $region5: #{tpu_custom_call.1} parent=1 // loop_body
      %s23 = ssub.s32 %s18, 1
      %s24 = ssub.s32 %s18, 2
      %s31 = sadd.s32 1, %s26
      %p32 = scmp.ge.s32.totalorder %s31, 2
      %s33 = scalar_select %p32, 0, %s31
      %s34 = sadd.s32 1, %s25
      %s35 = scalar_select %p32, %s34, %s25
      %p36 = scmp.ge.s32.totalorder %s35, 2
      %s37 = scalar_select %p36, 0, %s35
      %s38 = ssub.s32 %s25, %s37
      %s39 = ssub.s32 %s26, %s33
      %s40 = sor.u32 %s38, %s39
      %p41 = scmp.eq.s32.totalorder %s40, 0
      %s43 = sadd.s32 %s42, 1
      %s44 = scalar_select %p41, %s42, %s43
      %p47 = pneg %p41
      %p48 = scmp.eq.s32.totalorder %s18, 3
      %p49 = por %p47, %p48
      %p50 = scmp.ne.s32.totalorder %s42, %s45
      %p51 = scmp.eq.s32.totalorder %s18, 0
      %p52 = por %p50, %p51
      %p53 = scmp.ne.s32.totalorder %s42, %s45
      %p54 = scmp.eq.s32.totalorder %s23, 3
      %p55 = por %p53, %p54
      %p56 = scmp.ne.s32.totalorder %s45, %s46
      %p57 = scmp.eq.s32.totalorder %s23, 0
      %p58 = por %p56, %p57
      %p59 = scmp.ne.s32.totalorder %s45, %s46
      %p60 = scmp.eq.s32.totalorder %s24, 3
      %p61 = por %p59, %p60
      %p63 = scmp.ne.s32.totalorder %s46, %s62
      %p64 = scmp.eq.s32.totalorder %s24, 0
      %p65 = por %p63, %p64
      %s66 = ssub.s32 %s25, %s37
      %p67 = scmp.eq.s32.totalorder %s66, 0
      %s69 = sadd.s32 %s68, 1
      %s70 = scalar_select %p67, %s68, %s69
      %p73 = pneg %p67
      %p74 = scmp.eq.s32.totalorder %s18, 3
      %p75 = por %p73, %p74
      %p76 = scmp.ne.s32.totalorder %s68, %s71
      %p77 = scmp.eq.s32.totalorder %s18, 0
      %p78 = por %p76, %p77
      %p79 = scmp.ne.s32.totalorder %s68, %s71
      %p80 = scmp.eq.s32.totalorder %s23, 3
      %p81 = por %p79, %p80
      %p82 = scmp.ne.s32.totalorder %s71, %s72
      %p83 = scmp.eq.s32.totalorder %s23, 0
      %p84 = por %p82, %p83
      %p85 = scmp.ne.s32.totalorder %s71, %s72
      %p86 = scmp.eq.s32.totalorder %s24, 3
      %p87 = por %p85, %p86
      %p89 = scmp.ne.s32.totalorder %s72, %s88
      %p90 = scmp.eq.s32.totalorder %s24, 0
      %p91 = por %p89, %p90
      %s92 = ssub.s32 %s25, %s37
      %p93 = scmp.eq.s32.totalorder %s92, 0
      %s95 = sadd.s32 %s94, 1
      %s96 = scalar_select %p93, %s94, %s95
      %p99 = pneg %p93
      %p100 = scmp.eq.s32.totalorder %s18, 3
      %p101 = por %p99, %p100
      %p102 = scmp.ne.s32.totalorder %s94, %s97
      %p103 = scmp.eq.s32.totalorder %s18, 0
      %p104 = por %p102, %p103
      %p105 = scmp.ne.s32.totalorder %s94, %s97
      %p106 = scmp.eq.s32.totalorder %s23, 3
      %p107 = por %p105, %p106
      %p108 = scmp.ne.s32.totalorder %s97, %s98
      %p109 = scmp.eq.s32.totalorder %s23, 0
      %p110 = por %p108, %p109
      %p111 = scmp.ne.s32.totalorder %s97, %s98
      %p112 = scmp.eq.s32.totalorder %s24, 3
      %p113 = por %p111, %p112
      %p115 = scmp.ne.s32.totalorder %s98, %s114
      %p116 = scmp.eq.s32.totalorder %s24, 0
      %p117 = por %p115, %p116
      %s119 = sadd.s32 %s118, 1
      %p122 = scmp.eq.s32.totalorder %s18, 3
      %p123 = scmp.ne.s32.totalorder %s118, %s120
      %p124 = scmp.eq.s32.totalorder %s18, 0
      %p125 = por %p123, %p124
      %p126 = scmp.ne.s32.totalorder %s118, %s120
      %p127 = scmp.eq.s32.totalorder %s23, 3
      %p128 = por %p126, %p127
      %p129 = scmp.ne.s32.totalorder %s120, %s121
      %p130 = scmp.eq.s32.totalorder %s23, 0
      %p131 = por %p129, %p130
      %p132 = scmp.ne.s32.totalorder %s120, %s121
      %p133 = scmp.eq.s32.totalorder %s24, 3
      %p134 = por %p132, %p133
      %p136 = scmp.ne.s32.totalorder %s121, %s135
      %p137 = scmp.eq.s32.totalorder %s24, 0
      %p138 = por %p136, %p137
      %s140 = sadd.s32 %s139, 1
      %p143 = scmp.eq.s32.totalorder %s18, 3
      %p144 = scmp.ne.s32.totalorder %s139, %s141
      %p145 = scmp.eq.s32.totalorder %s18, 0
      %p146 = por %p144, %p145
      %p147 = scmp.ne.s32.totalorder %s139, %s141
      %p148 = scmp.eq.s32.totalorder %s23, 3
      %p149 = por %p147, %p148
      %p150 = scmp.ne.s32.totalorder %s141, %s142
      %p151 = scmp.eq.s32.totalorder %s23, 0
      %p152 = por %p150, %p151
      %p153 = scmp.ne.s32.totalorder %s141, %s142
      %p154 = scmp.eq.s32.totalorder %s24, 3
      %p155 = por %p153, %p154
      %p157 = scmp.ne.s32.totalorder %s142, %s156
      %p158 = scmp.eq.s32.totalorder %s24, 0
      %p159 = por %p157, %p158
      %s161 = sadd.s32 %s160, 1
      %p164 = scmp.eq.s32.totalorder %s18, 3
      %p165 = scmp.ne.s32.totalorder %s160, %s162
      %p166 = scmp.eq.s32.totalorder %s18, 0
      %p167 = por %p165, %p166
      %p168 = scmp.ne.s32.totalorder %s160, %s162
      %p169 = scmp.eq.s32.totalorder %s23, 3
      %p170 = por %p168, %p169
      %p171 = scmp.ne.s32.totalorder %s162, %s163
      %p172 = scmp.eq.s32.totalorder %s23, 0
      %p173 = por %p171, %p172
      %p174 = scmp.ne.s32.totalorder %s162, %s163
      %p175 = scmp.eq.s32.totalorder %s24, 3
      %p176 = por %p174, %p175
      %p178 = scmp.ne.s32.totalorder %s163, %s177
      %p179 = scmp.eq.s32.totalorder %s24, 0
      %p180 = por %p178, %p179
      %s182 = sadd.s32 %s181, 1
      %p185 = scmp.eq.s32.totalorder %s18, 3
      %p186 = scmp.ne.s32.totalorder %s181, %s183
      %p187 = scmp.eq.s32.totalorder %s18, 0
      %p188 = por %p186, %p187
      %p189 = scmp.ne.s32.totalorder %s181, %s183
      %p190 = scmp.eq.s32.totalorder %s23, 3
      %p191 = por %p189, %p190
      %p192 = scmp.ne.s32.totalorder %s183, %s184
      %p193 = scmp.eq.s32.totalorder %s23, 0
      %p194 = por %p192, %p193
      %p195 = scmp.ne.s32.totalorder %s183, %s184
      %p196 = scmp.eq.s32.totalorder %s24, 3
      %p197 = por %p195, %p196
      %p199 = scmp.ne.s32.totalorder %s184, %s198
      %p200 = scmp.eq.s32.totalorder %s24, 0
      %p201 = por %p199, %p200
      %s202 = ssub.s32 %s25, %s37
      %s203 = ssub.s32 %s26, %s33
      %s204 = sor.u32 %s202, %s203
      %p205 = scmp.eq.s32.totalorder %s204, 0
      %s207 = sadd.s32 %s206, 1
      %s208 = scalar_select %p205, %s206, %s207
      %p211 = pneg %p205
      %p212 = scmp.eq.s32.totalorder %s18, 3
      %p213 = por %p211, %p212
      %p214 = scmp.ne.s32.totalorder %s206, %s209
      %p215 = scmp.eq.s32.totalorder %s18, 0
      %p216 = por %p214, %p215
      %p217 = scmp.ne.s32.totalorder %s206, %s209
      %p218 = scmp.eq.s32.totalorder %s23, 3
      %p219 = por %p217, %p218
      %p220 = scmp.ne.s32.totalorder %s209, %s210
      %p221 = scmp.eq.s32.totalorder %s23, 0
      %p222 = por %p220, %p221
      %p223 = scmp.ne.s32.totalorder %s209, %s210
      %p224 = scmp.eq.s32.totalorder %s24, 3
      %p225 = por %p223, %p224
      %p227 = scmp.ne.s32.totalorder %s210, %s226
      %p228 = scmp.eq.s32.totalorder %s24, 0
      %p229 = por %p227, %p228
      %s230 = ssub.s32 %s25, %s37
      %s231 = ssub.s32 %s26, %s33
      %s232 = sor.u32 %s230, %s231
      %p233 = scmp.eq.s32.totalorder %s232, 0
      %s235 = sadd.s32 %s234, 1
      %s236 = scalar_select %p233, %s234, %s235
      %p239 = pneg %p233
      %p240 = scmp.eq.s32.totalorder %s18, 3
      %p241 = por %p239, %p240
      %p242 = scmp.ne.s32.totalorder %s234, %s237
      %p243 = scmp.eq.s32.totalorder %s18, 0
      %p244 = por %p242, %p243
      %p245 = scmp.ne.s32.totalorder %s234, %s237
      %p246 = scmp.eq.s32.totalorder %s23, 3
      %p247 = por %p245, %p246
      %p248 = scmp.ne.s32.totalorder %s237, %s238
      %p249 = scmp.eq.s32.totalorder %s23, 0
      %p250 = por %p248, %p249
      %p251 = scmp.ne.s32.totalorder %s237, %s238
      %p252 = scmp.eq.s32.totalorder %s24, 3
      %p253 = por %p251, %p252
      %p255 = scmp.ne.s32.totalorder %s238, %s254
      %p256 = scmp.eq.s32.totalorder %s24, 0
      %p257 = por %p255, %p256
      %p258 = scmp.le.s32.totalorder 1, %s18
      %p259 = scmp.lt.s32.totalorder %s18, 5
      %p260 = pnand %p258, %p259
      %p261 = pneg %p260
      // Predicated region
      $region9: #{tpu_custom_call.1} parent=5 // pred_check
        _
      $region10: #{tpu_custom_call.1} parent=5 // pred_check_branch
        %263 = sbr.rel (%p260) target = $region12
      $region11: #{tpu_custom_call.1} parent=5 // pred_region
        %s264 = ssub.s32 %s18, 1
        // Predicated region
        $region13: #{tpu_custom_call.1} parent=11 // pred_check
          %p265 = pneg %p131
        $region14: #{tpu_custom_call.1} parent=11 // pred_check_branch
          %267 = sbr.rel (%p265) target = $region16
        $region15: #{tpu_custom_call.1} parent=11 // pred_region
          _
        $region16: #{tpu_custom_call.1} parent=11 // pred_fallthru
          _
        // Predicated region
        $region17: #{tpu_custom_call.1} parent=11 // pred_check
          %p268 = pneg %p152
        $region18: #{tpu_custom_call.1} parent=11 // pred_check_branch
          %270 = sbr.rel (%p268) target = $region20
        $region19: #{tpu_custom_call.1} parent=11 // pred_region
          _
        $region20: #{tpu_custom_call.1} parent=11 // pred_fallthru
          _
        // Predicated region
        $region21: #{tpu_custom_call.1} parent=11 // pred_check
          %p271 = pneg %p173
        $region22: #{tpu_custom_call.1} parent=11 // pred_check_branch
          %273 = sbr.rel (%p271) target = $region24
        $region23: #{tpu_custom_call.1} parent=11 // pred_region
          _
        $region24: #{tpu_custom_call.1} parent=11 // pred_fallthru
          _
        // Predicated region
        $region25: #{tpu_custom_call.1} parent=11 // pred_check
          %p274 = pneg %p194
        $region26: #{tpu_custom_call.1} parent=11 // pred_check_branch
          %276 = sbr.rel (%p274) target = $region28
        $region27: #{tpu_custom_call.1} parent=11 // pred_region
          _
        $region28: #{tpu_custom_call.1} parent=11 // pred_fallthru
          _
      $region12: #{tpu_custom_call.1} parent=5 // pred_fallthru
        _
      %p277 = scmp.lt.s32.totalorder %s18, 4
      // Predicated region
      $region29: #{tpu_custom_call.1} parent=5 // pred_check
        %p278 = pneg %p277
      $region30: #{tpu_custom_call.1} parent=5 // pred_check_branch
        %280 = sbr.rel (%p278) target = $region32
      $region31: #{tpu_custom_call.1} parent=5 // pred_region
        // Predicated region
        $region33: #{tpu_custom_call.1} parent=31 // pred_check
          %p281 = pneg %p52
        $region34: #{tpu_custom_call.1} parent=31 // pred_check_branch
          %283 = sbr.rel (%p281) target = $region36
        $region35: #{tpu_custom_call.1} parent=31 // pred_region
          %p284 = scmp.lt.s32.totalorder %s25, 1
          %s285 = scalar_select %p284, %s25, 1
          %p286 = scmp.lt.s32.totalorder %s26, 1
          %s287 = scalar_select %p286, %s26, 1
          %s288 = smul.addr %s285, 2
          %s289 = sadd.s32 %s287, %s288
          %s290 = smul.addr %s289, 4
          %s291 = scalar_lea.vmem %s0, %s290
        $region36: #{tpu_custom_call.1} parent=31 // pred_fallthru
          _
        // Predicated region
        $region37: #{tpu_custom_call.1} parent=31 // pred_check
          %p292 = pneg %p78
        $region38: #{tpu_custom_call.1} parent=31 // pred_check_branch
          %294 = sbr.rel (%p292) target = $region40
        $region39: #{tpu_custom_call.1} parent=31 // pred_region
          %p295 = scmp.lt.s32.totalorder %s25, 1
          %s296 = scalar_select %p295, %s25, 1
          %s297 = smul.addr %s296, 8
          %s298 = scalar_lea.vmem %s1, %s297
        $region40: #{tpu_custom_call.1} parent=31 // pred_fallthru
          _
        // Predicated region
        $region41: #{tpu_custom_call.1} parent=31 // pred_check
          %p299 = pneg %p104
        $region42: #{tpu_custom_call.1} parent=31 // pred_check_branch
          %301 = sbr.rel (%p299) target = $region44
        $region43: #{tpu_custom_call.1} parent=31 // pred_region
          %p302 = scmp.lt.s32.totalorder %s25, 1
          %s303 = scalar_select %p302, %s25, 1
          %s304 = smul.addr %s303, 4
          %s305 = smul.addr %s304, 8
          %s306 = scalar_lea.vmem %s2, %s305
        $region44: #{tpu_custom_call.1} parent=31 // pred_fallthru
          _
      $region32: #{tpu_custom_call.1} parent=5 // pred_fallthru
        _
      %p307 = scmp.le.s32.totalorder 1, %s18
      %p308 = scmp.lt.s32.totalorder %s18, 5
      %p309 = pnand %p307, %p308
      %p310 = pneg %p309
      // Predicated region
      $region45: #{tpu_custom_call.1} parent=5 // pred_check
        _
      $region46: #{tpu_custom_call.1} parent=5 // pred_check_branch
        %312 = sbr.rel (%p309) target = $region48
      $region47: #{tpu_custom_call.1} parent=5 // pred_region
        %s313 = ssub.s32 %s18, 1
        %p314 = scmp.lt.s32.totalorder %s27, 1
        %s315 = scalar_select %p314, %s27, 1
        %p316 = scmp.lt.s32.totalorder %s28, 1
        %s317 = scalar_select %p316, %s28, 1
        %s318 = smul.addr %s315, 2
        %s319 = sadd.s32 %s317, %s318
        %s320 = smul.addr %s319, 4
        %s321 = scalar_lea.vmem %s0, %s320
        %p322 = pneg %p58
        %p323 = pneg %p55
        %p324 = scmp.lt.s32.totalorder %s27, 1
        %s325 = scalar_select %p324, %s27, 1
        %s326 = smul.addr %s325, 8
        %s327 = scalar_lea.vmem %s1, %s326
        %p328 = pneg %p84
        %p329 = pneg %p81
        %p330 = scmp.lt.s32.totalorder %s27, 1
        %s331 = scalar_select %p330, %s27, 1
        %s332 = smul.addr %s331, 4
        %s333 = smul.addr %s332, 8
        %s334 = scalar_lea.vmem %s2, %s333
        %p335 = pneg %p110
        %p336 = pneg %p107
        %p337 = pneg %p131
        %p338 = pneg %p128
        %p339 = pneg %p152
        %p340 = pneg %p149
        %p341 = pneg %p173
        %p342 = pneg %p170
        %p343 = pneg %p194
        %p344 = pneg %p191
        %p345 = pneg %p222
        %p346 = pneg %p219
        %s347 = sand.u32 %s209, 1
        %s348 = scalar_lea.sflag [#allocation3], %s347
        %s349 = sand.u32 %s209, 1
        %s350 = smul.addr %s349, 4
        %s351 = scalar_lea.vmem [#allocation2], %s350
        %p352 = pneg %p250
        %p353 = pneg %p247
        %s354 = smul.u32 16, %s28
        %p355 = scmp.lt.s32.totalorder %s27, 1
        %s356 = scalar_select %p355, %s27, 1
        %p357 = scmp.lt.s32.totalorder %s354, 31
        %s358 = scalar_select %p357, %s354, 31
        %s359 = smul.addr %s356, 32
        %s360 = sadd.s32 %s358, %s359
        %s361 = smul.addr %s360, 8
        %s362 = scalar_lea.vmem %s8, %s361
        %p363 = scmp.lt.s32.totalorder %s27, 1
        %s364 = scalar_select %p363, %s27, 1
        %p365 = scmp.lt.s32.totalorder %s28, 1
        %s366 = scalar_select %p365, %s28, 1
        %s367 = smul.addr %s364, 2
        %s368 = sadd.s32 %s366, %s367
        %s369 = smul.addr %s368, 4
        %s370 = scalar_lea.vmem %s0, %s369
        %p371 = scmp.lt.s32.totalorder %s27, 1
        %s372 = scalar_select %p371, %s27, 1
        %s373 = smul.addr %s372, 8
        %s374 = scalar_lea.vmem %s1, %s373
        %p375 = scmp.lt.s32.totalorder %s27, 1
        %s376 = scalar_select %p375, %s27, 1
        %s377 = smul.addr %s376, 4
        %s378 = smul.addr %s377, 8
        %s379 = scalar_lea.vmem %s2, %s378
        %s380 = smul.u32 16, %s28
        %p381 = scmp.lt.s32.totalorder %s27, 1
        %s382 = scalar_select %p381, %s27, 1
        %p383 = scmp.lt.s32.totalorder %s380, 31
        %s384 = scalar_select %p383, %s380, 31
        %s385 = smul.addr %s382, 32
        %s386 = sadd.s32 %s384, %s385
        %s387 = smul.addr %s386, 8
        %s388 = scalar_lea.vmem %s8, %s387
        %s389 = smul.u32 16, %s28
        %v390 = vld [vmem:[%s370] sm:$0xf]
        %v391 = vld [vmem:[%s3] sm:$0xff]
        %v392 = vld [vmem:[%s3 + $0x8] sm:$0xff]
        %v393 = vld [vmem:[%s3 + $0x10] sm:$0xff]
        %v394 = vld [vmem:[%s3 + $0x18] sm:$0xff]
        %v395 = vld [vmem:[%s4] sm:$0xff]
        %v396 = vld [vmem:[%s4 + $0x8] sm:$0xff]
        %v397 = vld [vmem:[%s4 + $0x10] sm:$0xff]
        %v398 = vld [vmem:[%s4 + $0x18] sm:$0xff]
        %400 = vset.pattern.permute.xlu0 0
        %401 = vperm.xlu0 %400, %v395
        %v402 = vpop.permute.xlu0 %401
        %405 = vset.pattern.permute.xlu0 0
        %406 = vperm.xlu0 %405, %v396
        %v407 = vpop.permute.xlu0 %406
        %410 = vset.pattern.permute.xlu0 0
        %411 = vperm.xlu0 %410, %v397
        %v412 = vpop.permute.xlu0 %411
        %415 = vset.pattern.permute.xlu0 0
        %416 = vperm.xlu0 %415, %v398
        %v417 = vpop.permute.xlu0 %416
        %vm419 = vcmask 31744
        %v421 = vsel %vm419, %v391, 0
        %v424 = vsel %vm419, %v392, 0
        %v427 = vsel %vm419, %v393, 0
        %v430 = vsel %vm419, %v394, 0
        %vm432 = vcmask 1043456
        %v434 = vsel %vm432, %v390, 0
        %436 = vmatprep.subr.mxu0 0.0
        %437 = vmatpush1.msra.mxu0 0.0
        %438 = vmatprep.subr.mxu0 0.0
        %439 = vmatpush1.msra.mxu0 0.0
        %440 = vmatprep.subr.mxu0 0.0
        %441 = vmatpush1.msra.mxu0 0.0
        %442 = vmatprep.subr.mxu0 0.0
        %443 = vmatpush1.msra.mxu0 0.0
        %444 = vmatprep.subr.mxu0 0.0
        %445 = vmatpush1.msra.mxu0 0.0
        %446 = vmatprep.subr.mxu0 0.0
        %447 = vmatpush1.msra.mxu0 0.0
        %448 = vmatprep.subr.mxu0 0.0
        %449 = vmatpush1.msra.mxu0 0.0
        %450 = vmatprep.subr.mxu0 0.0
        %451 = vmatpush1.msra.mxu0 0.0
        %452 = vmatprep.subr.mxu0 0.0
        %453 = vmatpush1.msra.mxu0 0.0
        %454 = vmatprep.subr.mxu0 0.0
        %455 = vmatpush1.msra.mxu0 0.0
        %456 = vmatprep.subr.mxu0 0.0
        %457 = vmatpush1.msra.mxu0 0.0
        %458 = vmatprep.subr.mxu0 0.0
        %459 = vmatpush1.msra.mxu0 0.0
        %460 = vmatprep.subr.mxu0 0.0
        %461 = vmatpush1.msra.mxu0 0.0
        %462 = vmatprep.subr.mxu0 0.0
        %463 = vmatpush1.msra.mxu0 0.0
        %464 = vmatprep.subr.mxu0 0.0
        %465 = vmatpush1.msra.mxu0 0.0
        %466 = vmatprep.subr.mxu0 0.0
        %467 = vmatpush1.msra.mxu0 %v434
        %468 = vmatprep.subr.mxu0 0.0
        %469 = vmatpush2.msra.mxu0 0.0
        %470 = vmatprep.subr.mxu0 0.0
        %471 = vmatpush2.msra.mxu0 0.0
        %472 = vmatprep.subr.mxu0 0.0
        %473 = vmatpush2.msra.mxu0 0.0
        %474 = vmatprep.subr.mxu0 0.0
        %475 = vmatpush2.msra.mxu0 0.0
        %476 = vmatprep.subr.mxu0 0.0
        %477 = vmatpush2.msra.mxu0 0.0
        %478 = vmatprep.subr.mxu0 0.0
        %479 = vmatpush2.msra.mxu0 0.0
        %480 = vmatprep.subr.mxu0 0.0
        %481 = vmatpush2.msra.mxu0 0.0
        %482 = vmatprep.subr.mxu0 0.0
        %483 = vmatpush2.msra.mxu0 0.0
        %484 = vmatprep.subr.mxu0 0.0
        %485 = vmatpush2.msra.mxu0 0.0
        %486 = vmatprep.subr.mxu0 0.0
        %487 = vmatpush2.msra.mxu0 0.0
        %488 = vmatprep.subr.mxu0 0.0
        %489 = vmatpush2.msra.mxu0 0.0
        %490 = vmatprep.subr.mxu0 0.0
        %491 = vmatpush2.msra.mxu0 0.0
        %492 = vmatprep.subr.mxu0 0.0
        %493 = vmatpush2.msra.mxu0 0.0
        %494 = vmatprep.subr.mxu0 0.0
        %495 = vmatpush2.msra.mxu0 0.0
        %496 = vmatprep.subr.mxu0 0.0
        %497 = vmatpush2.msra.mxu0 0.0
        %498 = vmatprep.subr.mxu0 0.0
        %499 = vmatpush2.msra.mxu0 0.0
        %500 = vmatprep.mubr.f32.mxu0 0.0
        %501 = vmatmul.mubr.f32.gmra.mxu0 %v421
        %v502 = vpop.f32.mrf.mxu0
        %v503 = vadd.f32 %v402, %v502
        %v504 = vpop.f32.mrf.mxu0
        %505 = vmatprep.mubr.f32.mxu0 0.0
        %506 = vmatmul.mubr.f32.gmra.mxu0 %v424
        %v507 = vpop.f32.mrf.mxu0
        %v508 = vadd.f32 %v407, %v507
        %v509 = vpop.f32.mrf.mxu0
        %510 = vmatprep.mubr.f32.mxu0 0.0
        %511 = vmatmul.mubr.f32.gmra.mxu0 %v427
        %v512 = vpop.f32.mrf.mxu0
        %v513 = vadd.f32 %v412, %v512
        %v514 = vpop.f32.mrf.mxu0
        %515 = vmatprep.mubr.f32.mxu0 0.0
        %516 = vmatmul.mubr.f32.gmra.mxu0 %v430
        %v517 = vpop.f32.mrf.mxu0
        %v518 = vadd.f32 %v417, %v517
        %v519 = vpop.f32.mrf.mxu0
        %520 = vdwg.mxu0
        %v521 = vld [vmem:[%s374] sm:$0xff]
        %vm522 = vcmask 261120
        %v524 = vsel %vm522, %v521, 0
        %526 = vmatprep.subr.mxu0 0.0
        %527 = vmatpush1.msra.mxu0 0.0
        %528 = vmatprep.subr.mxu0 0.0
        %529 = vmatpush1.msra.mxu0 0.0
        %530 = vmatprep.subr.mxu0 0.0
        %531 = vmatpush1.msra.mxu0 0.0
        %532 = vmatprep.subr.mxu0 0.0
        %533 = vmatpush1.msra.mxu0 0.0
        %534 = vmatprep.subr.mxu0 0.0
        %535 = vmatpush1.msra.mxu0 0.0
        %536 = vmatprep.subr.mxu0 0.0
        %537 = vmatpush1.msra.mxu0 0.0
        %538 = vmatprep.subr.mxu0 0.0
        %539 = vmatpush1.msra.mxu0 0.0
        %540 = vmatprep.subr.mxu0 0.0
        %541 = vmatpush1.msra.mxu0 0.0
        %542 = vmatprep.subr.mxu0 0.0
        %543 = vmatpush1.msra.mxu0 0.0
        %544 = vmatprep.subr.mxu0 0.0
        %545 = vmatpush1.msra.mxu0 0.0
        %546 = vmatprep.subr.mxu0 0.0
        %547 = vmatpush1.msra.mxu0 0.0
        %548 = vmatprep.subr.mxu0 0.0
        %549 = vmatpush1.msra.mxu0 0.0
        %550 = vmatprep.subr.mxu0 0.0
        %551 = vmatpush1.msra.mxu0 %v518
        %552 = vmatprep.subr.mxu0 0.0
        %553 = vmatpush1.msra.mxu0 %v513
        %554 = vmatprep.subr.mxu0 0.0
        %555 = vmatpush1.msra.mxu0 %v508
        %556 = vmatprep.subr.mxu0 0.0
        %557 = vmatpush1.msra.mxu0 %v503
        %558 = vmatprep.subr.mxu0 0.0
        %559 = vmatpush2.msra.mxu0 0.0
        %560 = vmatprep.subr.mxu0 0.0
        %561 = vmatpush2.msra.mxu0 0.0
        %562 = vmatprep.subr.mxu0 0.0
        %563 = vmatpush2.msra.mxu0 0.0
        %564 = vmatprep.subr.mxu0 0.0
        %565 = vmatpush2.msra.mxu0 0.0
        %566 = vmatprep.subr.mxu0 0.0
        %567 = vmatpush2.msra.mxu0 0.0
        %568 = vmatprep.subr.mxu0 0.0
        %569 = vmatpush2.msra.mxu0 0.0
        %570 = vmatprep.subr.mxu0 0.0
        %571 = vmatpush2.msra.mxu0 0.0
        %572 = vmatprep.subr.mxu0 0.0
        %573 = vmatpush2.msra.mxu0 0.0
        %574 = vmatprep.subr.mxu0 0.0
        %575 = vmatpush2.msra.mxu0 0.0
        %576 = vmatprep.subr.mxu0 0.0
        %577 = vmatpush2.msra.mxu0 0.0
        %578 = vmatprep.subr.mxu0 0.0
        %579 = vmatpush2.msra.mxu0 0.0
        %580 = vmatprep.subr.mxu0 0.0
        %581 = vmatpush2.msra.mxu0 0.0
        %582 = vmatprep.subr.mxu0 0.0
        %583 = vmatpush2.msra.mxu0 0.0
        %584 = vmatprep.subr.mxu0 0.0
        %585 = vmatpush2.msra.mxu0 0.0
        %586 = vmatprep.subr.mxu0 0.0
        %587 = vmatpush2.msra.mxu0 0.0
        %588 = vmatprep.subr.mxu0 0.0
        %589 = vmatpush2.msra.mxu0 0.0
        %590 = vmatprep.mubr.f32.mxu0 0.0
        %591 = vmatmul.mubr.f32.gmra.mxu0 %v524
        %v592 = vpop.f32.mrf.mxu0
        %v593 = vadd.f32 0.0, %v592
        %v594 = vpop.f32.mrf.mxu0
        %595 = vdwg.mxu0
        %v596 = vrot.slane %v593, 4
        %v597 = vmax.f32 %v593, %v596
        %v598 = vrot.slane %v597, 2
        %v599 = vmax.f32 %v597, %v598
        %v600 = vrot.slane %v599, 1
        %v601 = vmax.f32 %v599, %v600
        %v602 = vsub.f32 %v593, %v601
        %v603 = vmul.f32 %v602, 1.442695
        %v604 = vpow.pop %v603
        %v605 = vrot.slane %v604, 4
        %v606 = vadd.f32 %v604, %v605
        %v607 = vrot.slane %v606, 2
        %v608 = vadd.f32 %v606, %v607
        %v609 = vrot.slane %v608, 1
        %v610 = vadd.f32 %v608, %v609
        %v611 = vrcp.pop %v610
        %v612 = vmul.f32 %v610, %v611
        %v613 = vsub.f32 2.0, %v612
        %v614 = vmul.f32 %v611, %v613
        %v615 = vmul.f32 %v604, %v614
        %v616 = vld [vmem:[%s379] sm:$0xff]
        %v617 = vld [vmem:[%s379 + $0x8] sm:$0xff]
        %v618 = vld [vmem:[%s379 + $0x10] sm:$0xff]
        %v619 = vld [vmem:[%s379 + $0x18] sm:$0xff]
        %vm620 = vcmask 64512
        %v622 = vsel %vm620, %v616, 0
        %v625 = vsel %vm620, %v617, 0
        %v628 = vsel %vm620, %v618, 0
        %v631 = vsel %vm620, %v619, 0
        %633 = vmatprep.subr.mxu0 0.0
        %634 = vmatpush1.msra.mxu0 0.0
        %635 = vmatprep.subr.mxu0 0.0
        %636 = vmatpush1.msra.mxu0 0.0
        %637 = vmatprep.subr.mxu0 0.0
        %638 = vmatpush1.msra.mxu0 0.0
        %639 = vmatprep.subr.mxu0 0.0
        %640 = vmatpush1.msra.mxu0 0.0
        %641 = vmatprep.subr.mxu0 0.0
        %642 = vmatpush1.msra.mxu0 0.0
        %643 = vmatprep.subr.mxu0 0.0
        %644 = vmatpush1.msra.mxu0 0.0
        %645 = vmatprep.subr.mxu0 0.0
        %646 = vmatpush1.msra.mxu0 0.0
        %647 = vmatprep.subr.mxu0 0.0
        %648 = vmatpush1.msra.mxu0 0.0
        %649 = vmatprep.subr.mxu0 0.0
        %650 = vmatpush1.msra.mxu0 0.0
        %651 = vmatprep.subr.mxu0 0.0
        %652 = vmatpush1.msra.mxu0 0.0
        %653 = vmatprep.subr.mxu0 0.0
        %654 = vmatpush1.msra.mxu0 0.0
        %655 = vmatprep.subr.mxu0 0.0
        %656 = vmatpush1.msra.mxu0 0.0
        %657 = vmatprep.subr.mxu0 0.0
        %658 = vmatpush1.msra.mxu0 0.0
        %659 = vmatprep.subr.mxu0 0.0
        %660 = vmatpush1.msra.mxu0 0.0
        %661 = vmatprep.subr.mxu0 0.0
        %662 = vmatpush1.msra.mxu0 0.0
        %663 = vmatprep.subr.mxu0 0.0
        %664 = vmatpush1.msra.mxu0 %v615
        %665 = vmatprep.subr.mxu0 0.0
        %666 = vmatpush2.msra.mxu0 0.0
        %667 = vmatprep.subr.mxu0 0.0
        %668 = vmatpush2.msra.mxu0 0.0
        %669 = vmatprep.subr.mxu0 0.0
        %670 = vmatpush2.msra.mxu0 0.0
        %671 = vmatprep.subr.mxu0 0.0
        %672 = vmatpush2.msra.mxu0 0.0
        %673 = vmatprep.subr.mxu0 0.0
        %674 = vmatpush2.msra.mxu0 0.0
        %675 = vmatprep.subr.mxu0 0.0
        %676 = vmatpush2.msra.mxu0 0.0
        %677 = vmatprep.subr.mxu0 0.0
        %678 = vmatpush2.msra.mxu0 0.0
        %679 = vmatprep.subr.mxu0 0.0
        %680 = vmatpush2.msra.mxu0 0.0
        %681 = vmatprep.subr.mxu0 0.0
        %682 = vmatpush2.msra.mxu0 0.0
        %683 = vmatprep.subr.mxu0 0.0
        %684 = vmatpush2.msra.mxu0 0.0
        %685 = vmatprep.subr.mxu0 0.0
        %686 = vmatpush2.msra.mxu0 0.0
        %687 = vmatprep.subr.mxu0 0.0
        %688 = vmatpush2.msra.mxu0 0.0
        %689 = vmatprep.subr.mxu0 0.0
        %690 = vmatpush2.msra.mxu0 0.0
        %691 = vmatprep.subr.mxu0 0.0
        %692 = vmatpush2.msra.mxu0 0.0
        %693 = vmatprep.subr.mxu0 0.0
        %694 = vmatpush2.msra.mxu0 0.0
        %695 = vmatprep.subr.mxu0 0.0
        %696 = vmatpush2.msra.mxu0 0.0
        %697 = vmatprep.mubr.f32.mxu0 0.0
        %698 = vmatmul.mubr.f32.gmra.mxu0 %v622
        %v699 = vpop.f32.mrf.mxu0
        %v700 = vadd.f32 0.0, %v699
        %v701 = vpop.f32.mrf.mxu0
        %702 = vmatprep.mubr.f32.mxu0 0.0
        %703 = vmatmul.mubr.f32.gmra.mxu0 %v625
        %v704 = vpop.f32.mrf.mxu0
        %v705 = vadd.f32 0.0, %v704
        %v706 = vpop.f32.mrf.mxu0
        %707 = vmatprep.mubr.f32.mxu0 0.0
        %708 = vmatmul.mubr.f32.gmra.mxu0 %v628
        %v709 = vpop.f32.mrf.mxu0
        %v710 = vadd.f32 0.0, %v709
        %v711 = vpop.f32.mrf.mxu0
        %712 = vmatprep.mubr.f32.mxu0 0.0
        %713 = vmatmul.mubr.f32.gmra.mxu0 %v631
        %v714 = vpop.f32.mrf.mxu0
        %v715 = vadd.f32 0.0, %v714
        %v716 = vpop.f32.mrf.mxu0
        %717 = vdwg.mxu0
        %v718 = vld [vmem:[%s5] sm:$0xf]
        %v719 = vld [vmem:[%s6] sm:$0xf]
        %721 = vset.pattern.permute.xlu0 0
        %722 = vperm.xlu0 %721, %v719
        %v723 = vpop.permute.xlu0 %722
        %v726 = vsel %vm522, %v718, 0
        %728 = vmatprep.subr.mxu0 0.0
        %729 = vmatpush1.msra.mxu0 0.0
        %730 = vmatprep.subr.mxu0 0.0
        %731 = vmatpush1.msra.mxu0 0.0
        %732 = vmatprep.subr.mxu0 0.0
        %733 = vmatpush1.msra.mxu0 0.0
        %734 = vmatprep.subr.mxu0 0.0
        %735 = vmatpush1.msra.mxu0 0.0
        %736 = vmatprep.subr.mxu0 0.0
        %737 = vmatpush1.msra.mxu0 0.0
        %738 = vmatprep.subr.mxu0 0.0
        %739 = vmatpush1.msra.mxu0 0.0
        %740 = vmatprep.subr.mxu0 0.0
        %741 = vmatpush1.msra.mxu0 0.0
        %742 = vmatprep.subr.mxu0 0.0
        %743 = vmatpush1.msra.mxu0 0.0
        %744 = vmatprep.subr.mxu0 0.0
        %745 = vmatpush1.msra.mxu0 0.0
        %746 = vmatprep.subr.mxu0 0.0
        %747 = vmatpush1.msra.mxu0 0.0
        %748 = vmatprep.subr.mxu0 0.0
        %749 = vmatpush1.msra.mxu0 0.0
        %750 = vmatprep.subr.mxu0 0.0
        %751 = vmatpush1.msra.mxu0 0.0
        %752 = vmatprep.subr.mxu0 0.0
        %753 = vmatpush1.msra.mxu0 %v715
        %754 = vmatprep.subr.mxu0 0.0
        %755 = vmatpush1.msra.mxu0 %v710
        %756 = vmatprep.subr.mxu0 0.0
        %757 = vmatpush1.msra.mxu0 %v705
        %758 = vmatprep.subr.mxu0 0.0
        %759 = vmatpush1.msra.mxu0 %v700
        %760 = vmatprep.subr.mxu0 0.0
        %761 = vmatpush2.msra.mxu0 0.0
        %762 = vmatprep.subr.mxu0 0.0
        %763 = vmatpush2.msra.mxu0 0.0
        %764 = vmatprep.subr.mxu0 0.0
        %765 = vmatpush2.msra.mxu0 0.0
        %766 = vmatprep.subr.mxu0 0.0
        %767 = vmatpush2.msra.mxu0 0.0
        %768 = vmatprep.subr.mxu0 0.0
        %769 = vmatpush2.msra.mxu0 0.0
        %770 = vmatprep.subr.mxu0 0.0
        %771 = vmatpush2.msra.mxu0 0.0
        %772 = vmatprep.subr.mxu0 0.0
        %773 = vmatpush2.msra.mxu0 0.0
        %774 = vmatprep.subr.mxu0 0.0
        %775 = vmatpush2.msra.mxu0 0.0
        %776 = vmatprep.subr.mxu0 0.0
        %777 = vmatpush2.msra.mxu0 0.0
        %778 = vmatprep.subr.mxu0 0.0
        %779 = vmatpush2.msra.mxu0 0.0
        %780 = vmatprep.subr.mxu0 0.0
        %781 = vmatpush2.msra.mxu0 0.0
        %782 = vmatprep.subr.mxu0 0.0
        %783 = vmatpush2.msra.mxu0 0.0
        %784 = vmatprep.subr.mxu0 0.0
        %785 = vmatpush2.msra.mxu0 0.0
        %786 = vmatprep.subr.mxu0 0.0
        %787 = vmatpush2.msra.mxu0 0.0
        %788 = vmatprep.subr.mxu0 0.0
        %789 = vmatpush2.msra.mxu0 0.0
        %790 = vmatprep.subr.mxu0 0.0
        %791 = vmatpush2.msra.mxu0 0.0
        %792 = vmatprep.mubr.f32.mxu0 0.0
        %793 = vmatmul.mubr.f32.gmra.mxu0 %v726
        %v794 = vpop.f32.mrf.mxu0
        %v795 = vadd.f32 %v723, %v794
        %v796 = vpop.f32.mrf.mxu0
        %797 = vdwg.mxu0
        %798 = vst [vmem:[%s351] sm:$0xf] %v795
        %799 = vxpose.xlu0.b32.start [1/16] %v615, 128
        %800 = vxpose.xlu0.b32.cont [2/16] 0.0, 128
        %801 = vxpose.xlu0.b32.cont [3/16] 0.0, 128
        %802 = vxpose.xlu0.b32.cont [4/16] 0.0, 128
        %803 = vxpose.xlu0.b32.cont [5/16] 0.0, 128
        %804 = vxpose.xlu0.b32.cont [6/16] 0.0, 128
        %805 = vxpose.xlu0.b32.cont [7/16] 0.0, 128
        %806 = vxpose.xlu0.b32.cont [8/16] 0.0, 128
        %807 = vxpose.xlu0.b32.cont [9/16] 0.0, 128
        %808 = vxpose.xlu0.b32.cont [10/16] 0.0, 128
        %809 = vxpose.xlu0.b32.cont [11/16] 0.0, 128
        %810 = vxpose.xlu0.b32.cont [12/16] 0.0, 128
        %811 = vxpose.xlu0.b32.cont [13/16] 0.0, 128
        %812 = vxpose.xlu0.b32.cont [14/16] 0.0, 128
        %813 = vxpose.xlu0.b32.cont [15/16] 0.0, 128
        %814 = vxpose.xlu0.b32.end [16/16] 0.0, 128
        %v815 = vpop.trf.xlu0
        %v816 = vpop.trf.xlu0
        %v817 = vpop.trf.xlu0
        %v818 = vpop.trf.xlu0
        %v819 = vpop.trf.xlu0
        %v820 = vpop.trf.xlu0
        %v821 = vpop.trf.xlu0
        %v822 = vpop.trf.xlu0
        %v823 = vpop.trf.xlu0
        %v824 = vpop.trf.xlu0
        %v825 = vpop.trf.xlu0
        %v826 = vpop.trf.xlu0
        %v827 = vpop.trf.xlu0
        %v828 = vpop.trf.xlu0
        %v829 = vpop.trf.xlu0
        %v830 = vpop.trf.xlu0
        %831 = vst.msk [vmem:[%s388] sm:$0xff] %vm620, %v815
        %832 = vst.msk [vmem:[%s388 + $0x8] sm:$0xff] %vm620, %v816
        %833 = vst.msk [vmem:[%s388 + $0x10] sm:$0xff] %vm620, %v817
        %834 = vst.msk [vmem:[%s388 + $0x18] sm:$0xff] %vm620, %v818
        %835 = vst.msk [vmem:[%s388 + $0x20] sm:$0xff] %vm620, %v819
        %836 = vst.msk [vmem:[%s388 + $0x28] sm:$0xff] %vm620, %v820
        %837 = vst.msk [vmem:[%s388 + $0x30] sm:$0xff] %vm620, %v821
        %838 = vst.msk [vmem:[%s388 + $0x38] sm:$0xff] %vm620, %v822
        %839 = vst.msk [vmem:[%s388 + $0x40] sm:$0xff] %vm620, %v823
        %840 = vst.msk [vmem:[%s388 + $0x48] sm:$0xff] %vm620, %v824
        %841 = vst.msk [vmem:[%s388 + $0x50] sm:$0xff] %vm620, %v825
        %842 = vst.msk [vmem:[%s388 + $0x58] sm:$0xff] %vm620, %v826
        %843 = vst.msk [vmem:[%s388 + $0x60] sm:$0xff] %vm620, %v827
        %844 = vst.msk [vmem:[%s388 + $0x68] sm:$0xff] %vm620, %v828
        %845 = vst.msk [vmem:[%s388 + $0x70] sm:$0xff] %vm620, %v829
        %846 = vst.msk [vmem:[%s388 + $0x78] sm:$0xff] %vm620, %v830
        %s847 = sand.u32 %s209, 1
        %s848 = scalar_lea.sflag [#allocation3], %s847
        %s849 = sand.u32 %s209, 1
        %s850 = smul.addr %s849, 4
        %s851 = scalar_lea.vmem [#allocation2], %s850
        %s852 = smul.u32 16, %s28
        %p853 = scmp.lt.s32.totalorder %s27, 1
        %s854 = scalar_select %p853, %s27, 1
        %p855 = scmp.lt.s32.totalorder %s852, 31
        %s856 = scalar_select %p855, %s852, 31
        %s857 = smul.addr %s854, 32
        %s858 = sadd.s32 %s856, %s857
        %s859 = smul.addr %s858, 8
        %s860 = scalar_lea.vmem %s8, %s859
        // Predicated region
        $region49: #{tpu_custom_call.1} parent=47 // pred_check
          %p861 = pneg %p219
        $region50: #{tpu_custom_call.1} parent=47 // pred_check_branch
          %863 = sbr.rel (%p861) target = $region52
        $region51: #{tpu_custom_call.1} parent=47 // pred_region
          %s865 = ssub.s32 64, 64
          %866 = vsyncadd %s848, %s865
          %s867 = smul.addr %s27, 2
          %s868 = sadd.s32 %s28, %s867
          %s869 = smul.addr %s868, 64
          %s870 = scalar_lea.hbm %s7, %s869
          %s872 = sshll.u32 %s851, 4
          %s873 = int_to_ptr.vmem [resolvable:$true] %s872
          %875 = dma.vmem_to_hbm [thread:$0]  %s873, 64, %s870, %s848
        $region52: #{tpu_custom_call.1} parent=47 // pred_fallthru
          _
        // Predicated region
        $region53: #{tpu_custom_call.1} parent=47 // pred_check
          %p876 = pneg %p247
        $region54: #{tpu_custom_call.1} parent=47 // pred_check_branch
          %878 = sbr.rel (%p876) target = $region56
        $region55: #{tpu_custom_call.1} parent=47 // pred_region
          %s879 = smul.u32 16, %s28
        $region56: #{tpu_custom_call.1} parent=47 // pred_fallthru
          _
      $region48: #{tpu_custom_call.1} parent=5 // pred_fallthru
        _
      %p880 = scmp.le.s32.totalorder 2, %s18
      // Predicated region
      $region57: #{tpu_custom_call.1} parent=5 // pred_check
        %p881 = pneg %p880
      $region58: #{tpu_custom_call.1} parent=5 // pred_check_branch
        %883 = sbr.rel (%p881) target = $region60
      $region59: #{tpu_custom_call.1} parent=5 // pred_region
        %s884 = ssub.s32 %s18, 2
        // Predicated region
        $region61: #{tpu_custom_call.1} parent=59 // pred_check
          %p885 = pneg %p225
        $region62: #{tpu_custom_call.1} parent=59 // pred_check_branch
          %887 = sbr.rel (%p885) target = $region64
        $region63: #{tpu_custom_call.1} parent=59 // pred_region
          %s888 = sand.u32 %s210, 1
          %s889 = scalar_lea.sflag [#allocation3], %s888
          %s890 = sand.u32 %s210, 1
          %s891 = smul.addr %s890, 4
          %s892 = scalar_lea.vmem [#allocation2], %s891
          %893 = dma.done %s889, 64
        $region64: #{tpu_custom_call.1} parent=59 // pred_fallthru
          _
        // Predicated region
        $region65: #{tpu_custom_call.1} parent=59 // pred_check
          %p894 = pneg %p253
        $region66: #{tpu_custom_call.1} parent=59 // pred_check_branch
          %896 = sbr.rel (%p894) target = $region68
        $region67: #{tpu_custom_call.1} parent=59 // pred_region
          %s897 = smul.u32 16, %s30
          %p898 = scmp.lt.s32.totalorder %s29, 1
          %s899 = scalar_select %p898, %s29, 1
          %p900 = scmp.lt.s32.totalorder %s897, 31
          %s901 = scalar_select %p900, %s897, 31
          %s902 = smul.addr %s899, 32
          %s903 = sadd.s32 %s901, %s902
          %s904 = smul.addr %s903, 8
          %s905 = scalar_lea.vmem %s8, %s904
        $region68: #{tpu_custom_call.1} parent=59 // pred_fallthru
          _
      $region60: #{tpu_custom_call.1} parent=5 // pred_fallthru
        _
    $region6: #{tpu_custom_call.1} parent=1 // loop_footer
      %s22 = sadd.s32 1, %s18
    $region7: #{tpu_custom_call.1} parent=1 // loop_footer_branch
      %17 = sbr.rel target = $region3
    $region8: #{tpu_custom_call.1} parent=1 // loop_exit
      _
    %906 = vsyncpa [#allocation3], 1
    %s907 = scalar_lea.sflag [#allocation3], 1
    %908 = vsyncpa %s907, 1

</llo_original>
